<compile_context>
chip_gen: v5e
topology: v5e:2x2
jax: 0.10.0
libtpu: 0.0.40
codegen_flags: <defaults>
</compile_context>

<pallas_src>
import functools

import jax
import jax.numpy as jnp
from jax.experimental import pallas as pl
from jax.experimental.pallas import tpu as pltpu


def _focal_loss_kernel(x_ref, t_ref, alpha_ref, out_ref, *, gamma, total_l,
                       accumulate, masked, mxu_reduce):
    j = pl.program_id(1)

    if accumulate:
        @pl.when(j == 0)
        def _():
            out_ref[...] = jnp.zeros_like(out_ref)

    x = x_ref[0].astype(jnp.float32)        # (C, TL) logits, upcast in-vreg
    t = t_ref[0].astype(jnp.int32)          # (1, TL) targets, upcast in-vreg
    a = alpha_ref[0].astype(jnp.float32)    # (C, 1)  per-class alpha
    c, tl = x.shape

    # log_softmax along the class (sublane) axis
    m = jnp.max(x, axis=0, keepdims=True)                # (1, TL)
    z = x - m                                             # (C, TL)
    e = jnp.exp(z)
    if mxu_reduce:
        # Idle-MXU offload of the denominator reduce (only enabled for large C).
        sum_e = jnp.dot(jnp.ones((1, c), jnp.float32), e,
                        preferred_element_type=jnp.float32)
    else:
        sum_e = jnp.sum(e, axis=0, keepdims=True)
    lse = jnp.log(sum_e)                                  # (1, TL)

    # gather logpt / alpha at the target class via one-hot select
    cls = jax.lax.broadcasted_iota(jnp.int32, (c, tl), 0)
    onehot = (cls == t).astype(jnp.float32)               # (C, TL)
    zt = jnp.sum(z * onehot, axis=0, keepdims=True)       # (1, TL)
    logpt = zt - lse
    pt = jnp.exp(logpt)
    at = jnp.sum(a * onehot, axis=0, keepdims=True)       # (1, TL)

    # focal factor: repeated VPU multiply for integer gamma (avoids EUP log+exp);
    # seeded from (1 - pt) directly -> gamma-1 multiplies.
    one_minus_pt = 1.0 - pt
    g = float(gamma)
    if g.is_integer() and 0.0 <= g <= 16.0:
        gi = int(g)
        if gi == 0:
            focal = jnp.ones_like(pt)
        else:
            focal = one_minus_pt
            for _ in range(gi - 1):
                focal = focal * one_minus_pt
    else:
        focal = jnp.power(one_minus_pt, jnp.float32(g))

    loss = -1.0 * focal * logpt * at                      # (1, TL)

    def _masked_loss():
        # Only the last tile can run past L; the where() also kills any NaN/Inf
        # arising from unspecified out-of-bounds block data in the tail lanes.
        lane = jax.lax.broadcasted_iota(jnp.int32, (1, tl), 1)
        valid = (j * tl + lane) < total_l
        return jnp.where(valid, loss, 0.0)

    if accumulate:
        # Resident per-batch lane accumulator (single-TC chips).
        if masked:
            last = pl.num_programs(1) - 1

            @pl.when(j == last)
            def _():
                out_ref[...] += _masked_loss()[None]

            @pl.when(j != last)
            def _():
                out_ref[...] += loss[None]
        else:
            out_ref[...] += loss[None]
    else:
        # Disjoint per-j partial outputs (v7x: both grid axes parallel).
        if masked:
            last = pl.num_programs(1) - 1

            @pl.when(j == last)
            def _():
                out_ref[...] = _masked_loss()[None]

            @pl.when(j != last)
            def _():
                out_ref[...] = loss[None]
        else:
            out_ref[...] = loss[None]


def _tpu_vmem_and_gen():
    """Best-effort query of VMEM capacity and whether this looks like a v7x part."""
    vmem_bytes = None
    try:
        info = pltpu.get_tpu_info()
        vmem_bytes = getattr(info, "vmem_capacity_bytes", None)
    except Exception:
        vmem_bytes = None
    kind = ""
    try:
        kind = jax.devices()[0].device_kind.lower()
    except Exception:
        kind = ""
    is_v7 = ("v7" in kind) or ("7x" in kind)
    if not vmem_bytes:
        vmem_bytes = (64 if is_v7 else 128) * 1024 * 1024
    return int(vmem_bytes), is_v7


def focal_loss(logits, target, *, gamma=2.0, alpha=None, size_average=True,
               max_tile_lanes=131072):
    """logits: (N, C, H, W) / (N, C, ...) or (N, C); target: matching int labels."""
    if logits.ndim > 2:
        b, c = logits.shape[0], logits.shape[1]
        x = logits.reshape(b, c, -1)          # (B, C, L) — native layout, no copy
    else:
        # (N, C): one small transpose so classes -> sublanes, samples -> lanes
        c = logits.shape[1]
        x = logits.T.reshape(1, c, -1)
        b = 1
    l = x.shape[2]
    m_rows = b * l

    # Targets: only re-cast if a cast is needed anyway; then use a narrow int to
    # shrink the HBM target stream (kernel upcasts in-vreg before the compare).
    tgt = target.reshape(b, 1, l)
    if tgt.dtype == jnp.int32:
        t = tgt
    else:
        t = tgt.astype(jnp.int16 if c <= 32767 else jnp.int32)

    # alpha handling (mirrors PyTorch __init__ semantics)
    # NOTE: scalar alpha with C > 2 mirrors torch's out-of-range gather being
    # undefined; here classes >= 2 simply get alpha = 0 (documented, not an error).
    if alpha is None:
        alpha_vec = jnp.ones((c,), jnp.float32)
    elif isinstance(alpha, (float, int)) and not isinstance(alpha, bool):
        av = [float(alpha), 1.0 - float(alpha)]
        av = (av + [0.0] * max(0, c - 2))[:c]
        alpha_vec = jnp.array(av, jnp.float32)
    else:
        alpha_vec = jnp.asarray(alpha, jnp.float32).reshape(-1)
        if alpha_vec.shape[0] < c:
            alpha_vec = jnp.concatenate(
                [alpha_vec, jnp.zeros((c - alpha_vec.shape[0],), jnp.float32)])
        else:
            alpha_vec = alpha_vec[:c]
    alpha_arr = alpha_vec.reshape(1, c, 1)

    # ---- generation-aware tile sizing from the full per-step VMEM footprint ----
    vmem_cap, is_v7 = _tpu_vmem_and_gen()
    # Keep the live footprint well under physical VMEM (v7x: 64 MiB/TC).
    block_budget = min(48 * 1024 * 1024, int(vmem_cap * 0.62))
    vmem_limit = min(vmem_cap - 8 * 1024 * 1024, block_budget + 16 * 1024 * 1024)

    x_item = jnp.dtype(x.dtype).itemsize
    t_item = jnp.dtype(t.dtype).itemsize
    # Per-lane bytes: double-buffered x + t blocks, up to 2 output buffers, plus an
    # allowance of ~6 f32 (C, TL)-shaped in-kernel temporaries.
    per_lane = 2 * (c * x_item + t_item) + 2 * 4 + 6 * c * 4
    tile_l = block_budget // max(1, per_lane)
    tile_l = max(128, min(max_tile_lanes, (tile_l // 128) * 128))
    tile_l = min(tile_l, pl.cdiv(l, 128) * 128)
    n_l = pl.cdiv(l, tile_l)
    masked = (l % tile_l) != 0

    # v7x has two TensorCores: for small/odd batch the resident-accumulator design
    # would leave one core idle (L axis forced "arbitrary"), so switch to disjoint
    # per-j partial outputs and mark both grid axes parallel. Single-TC chips keep
    # the accumulator (less HBM writeback, parallel-vs-arbitrary is a wash there).
    use_partial = bool(is_v7 and (b % 2 == 1) and (n_l > 1))
    accumulate = not use_partial

    mxu_reduce = c >= 64

    kernel = functools.partial(
        _focal_loss_kernel, gamma=float(gamma), total_l=l,
        accumulate=accumulate, masked=masked, mxu_reduce=mxu_reduce)

    if accumulate:
        out_shape = jax.ShapeDtypeStruct((b, 1, tile_l), jnp.float32)
        out_specs = pl.BlockSpec((1, 1, tile_l), lambda bi, j: (bi, 0, 0))
        dim_sem = ("parallel", "arbitrary")
    else:
        out_shape = jax.ShapeDtypeStruct((b, 1, n_l * tile_l), jnp.float32)
        out_specs = pl.BlockSpec((1, 1, tile_l), lambda bi, j: (bi, 0, j))
        dim_sem = ("parallel", "parallel")

    part_out = pl.pallas_call(
        kernel,
        out_shape=out_shape,
        grid_spec=pltpu.PrefetchScalarGridSpec(
            num_scalar_prefetch=0,
            grid=(b, n_l),
            in_specs=[
                pl.BlockSpec((1, c, tile_l), lambda bi, j: (bi, 0, j)),
                pl.BlockSpec((1, 1, tile_l), lambda bi, j: (bi, 0, j)),
                pl.BlockSpec((1, c, 1), lambda bi, j: (0, 0, 0)),
            ],
            out_specs=out_specs,
        ),
        compiler_params=pltpu.CompilerParams(
            dimension_semantics=dim_sem,
            vmem_limit_bytes=int(vmem_limit)),
    )(x, t, alpha_arr)

    total = jnp.sum(part_out)
    if size_average:
        return total / jnp.float32(m_rows)
    return total


def _focal_loss_ref(logits, target, *, gamma=2.0, alpha=None, size_average=True):
    n, c = logits.shape[0], logits.shape[1]
    x = logits.reshape(n, c, -1).transpose(0, 2, 1).reshape(-1, c)
    t = target.reshape(-1).astype(jnp.int32)
    logp = jax.nn.log_softmax(x.astype(jnp.float32), axis=1)
    logpt = jnp.take_along_axis(logp, t[:, None], axis=1)[:, 0]
    pt = jnp.exp(logpt)
    if alpha is not None:
        a = jnp.asarray(alpha, jnp.float32)
        logpt = logpt * a[t]
    loss = -1.0 * (1.0 - pt) ** gamma * logpt
    return loss.mean() if size_average else loss.sum()


if __name__ == "__main__":
    key = jax.random.PRNGKey(0)
    k1, k2 = jax.random.split(key)
    N, C, H, W = 2, 4, 16, 16
    logits = jax.random.normal(k1, (N, C, H, W), jnp.float32)
    target = jax.random.randint(k2, (N, H, W), 0, C, jnp.int32)
    alpha = [0.25, 0.25, 0.25, 0.25]

    out = focal_loss(logits, target, gamma=2.0, alpha=alpha, size_average=True)
    out = jax.block_until_ready(out)

    ref = _focal_loss_ref(logits, target, gamma=2.0, alpha=alpha,
                          size_average=True)
    assert jnp.allclose(out, ref, rtol=1e-5, atol=1e-6), (out, ref)
    print("KERNEL_OK")
</pallas_src>

<mosaic_0001>
module attributes {stable_mosaic.version = 11 : i64} {
  func.func @_focal_loss_kernel(%arg0: i32, %arg1: i32, %arg2: memref<1x4x256xf32, #tpu.memory_space<vmem>>, %arg3: memref<1x1x256xi32, #tpu.memory_space<vmem>>, %arg4: memref<1x4x1xf32, #tpu.memory_space<vmem>>, %arg5: memref<1x1x256xf32, #tpu.memory_space<vmem>>) attributes {dimension_semantics = [#tpu.dimension_semantics<parallel>, #tpu.dimension_semantics<arbitrary>], iteration_bounds = array<i64: 2, 1>, scalar_prefetch = 0 : i64, scratch_operands = 0 : i64, tpu.core_type = #tpu.core_type<tc>, window_params = [{transform_indices = @transform_0, window_bounds = array<i64: 1, 4, 256>}, {transform_indices = @transform_1, window_bounds = array<i64: 1, 1, 256>}, {pipeline_mode = #tpu.pipeline_mode<synchronous>, transform_indices = @transform_2, window_bounds = array<i64: 1, 4, 1>}, {transform_indices = @transform_3, window_bounds = array<i64: 1, 1, 256>}]} {
    %c0_i32 = arith.constant 0 : i32
    %0 = arith.cmpi eq, %arg1, %c0_i32 : i32
    %1 = arith.extui %0 : i1 to i32
    %c0_i32_0 = arith.constant 0 : i32
    %2 = arith.cmpi ne, %1, %c0_i32_0 : i32
    scf.if %2 {
      %cst_20 = arith.constant 0.000000e+00 : f32
      %42 = vector.broadcast %cst_20 : f32 to vector<1x1x256xf32>
      %c0_21 = arith.constant 0 : index
      %c0_22 = arith.constant 0 : index
      %c0_23 = arith.constant 0 : index
      %43 = vector.load %arg5[%c0_21, %c0_22, %c0_23] : memref<1x1x256xf32, #tpu.memory_space<vmem>>, vector<1x1x256xf32>
      tpu.vector_store %arg5[%c0_21, %c0_22, %c0_23], %42 {strides = array<i32>} : memref<1x1x256xf32, #tpu.memory_space<vmem>>, vector<1x1x256xf32>,
    } else {
    }
    %c0 = arith.constant 0 : index
    %c0_1 = arith.constant 0 : index
    %c0_2 = arith.constant 0 : index
    %3 = vector.load %arg2[%c0, %c0_1, %c0_2] : memref<1x4x256xf32, #tpu.memory_space<vmem>>, vector<1x4x256xf32>
    %4 = vector.shape_cast %3 : vector<1x4x256xf32> to vector<4x256xf32>
    %c0_3 = arith.constant 0 : index
    %c0_4 = arith.constant 0 : index
    %c0_5 = arith.constant 0 : index
    %5 = vector.load %arg3[%c0_3, %c0_4, %c0_5] : memref<1x1x256xi32, #tpu.memory_space<vmem>>, vector<1x1x256xi32>
    %6 = vector.shape_cast %5 : vector<1x1x256xi32> to vector<1x256xi32>
    %c0_6 = arith.constant 0 : index
    %c0_7 = arith.constant 0 : index
    %c0_8 = arith.constant 0 : index
    %7 = vector.load %arg4[%c0_6, %c0_7, %c0_8] : memref<1x4x1xf32, #tpu.memory_space<vmem>>, vector<1x4x1xf32>
    %8 = vector.shape_cast %7 : vector<1x4x1xf32> to vector<4x1xf32>
    %cst = arith.constant dense<0xFF800000> : vector<256xf32>
    %9 = vector.multi_reduction <maximumf>, %4, %cst [0] : vector<4x256xf32> to vector<256xf32>
    %10 = vector.shape_cast %9 : vector<256xf32> to vector<1x256xf32>
    %11 = vector.broadcast %10 : vector<1x256xf32> to vector<4x256xf32>
    %12 = arith.subf %4, %11 : vector<4x256xf32>
    %13 = math.exp %12 : vector<4x256xf32>
    %cst_9 = arith.constant dense<0.000000e+00> : vector<256xf32>
    %14 = vector.multi_reduction <add>, %13, %cst_9 [0] : vector<4x256xf32> to vector<256xf32>
    %15 = vector.shape_cast %14 : vector<256xf32> to vector<1x256xf32>
    %16 = math.log %15 : vector<1x256xf32>
    %17 = tpu.iota {dimensions = array<i32: 0>} : vector<4x256xi32>
    %18 = vector.broadcast %6 : vector<1x256xi32> to vector<4x256xi32>
    %19 = arith.cmpi eq, %17, %18 : vector<4x256xi32>
    %20 = arith.extui %19 : vector<4x256xi1> to vector<4x256xi32>
    %21 = arith.sitofp %20 : vector<4x256xi32> to vector<4x256xf32>
    %22 = arith.mulf %12, %21 : vector<4x256xf32>
    %cst_10 = arith.constant dense<0.000000e+00> : vector<256xf32>
    %23 = vector.multi_reduction <add>, %22, %cst_10 [0] : vector<4x256xf32> to vector<256xf32>
    %24 = vector.shape_cast %23 : vector<256xf32> to vector<1x256xf32>
    %25 = arith.subf %24, %16 : vector<1x256xf32>
    %26 = math.exp %25 : vector<1x256xf32>
    %27 = vector.broadcast %8 : vector<4x1xf32> to vector<4x256xf32>
    %28 = arith.mulf %27, %21 : vector<4x256xf32>
    %cst_11 = arith.constant dense<0.000000e+00> : vector<256xf32>
    %29 = vector.multi_reduction <add>, %28, %cst_11 [0] : vector<4x256xf32> to vector<256xf32>
    %30 = vector.shape_cast %29 : vector<256xf32> to vector<1x256xf32>
    %cst_12 = arith.constant 1.000000e+00 : f32
    %31 = vector.broadcast %cst_12 : f32 to vector<1x256xf32>
    %32 = arith.subf %31, %26 : vector<1x256xf32>
    %33 = arith.mulf %32, %32 : vector<1x256xf32>
    %cst_13 = arith.constant -1.000000e+00 : f32
    %34 = vector.broadcast %cst_13 : f32 to vector<1x256xf32>
    %35 = arith.mulf %34, %33 : vector<1x256xf32>
    %36 = arith.mulf %35, %25 : vector<1x256xf32>
    %37 = arith.mulf %36, %30 : vector<1x256xf32>
    %c0_14 = arith.constant 0 : index
    %c0_15 = arith.constant 0 : index
    %c0_16 = arith.constant 0 : index
    %38 = vector.load %arg5[%c0_14, %c0_15, %c0_16] : memref<1x1x256xf32, #tpu.memory_space<vmem>>, vector<1x1x256xf32>
    %39 = vector.shape_cast %37 : vector<1x256xf32> to vector<1x1x256xf32>
    %40 = arith.addf %38, %39 : vector<1x1x256xf32>
    %c0_17 = arith.constant 0 : index
    %c0_18 = arith.constant 0 : index
    %c0_19 = arith.constant 0 : index
    %41 = vector.load %arg5[%c0_17, %c0_18, %c0_19] : memref<1x1x256xf32, #tpu.memory_space<vmem>>, vector<1x1x256xf32>
    tpu.vector_store %arg5[%c0_17, %c0_18, %c0_19], %40 {strides = array<i32>} : memref<1x1x256xf32, #tpu.memory_space<vmem>>, vector<1x1x256xf32>,
    return
  }
  func.func @transform_0(%arg0: i32, %arg1: i32) -> (i32, i32, i32) {
    %c0_i32 = arith.constant 0 : i32
    %c0_i32_0 = arith.constant 0 : i32
    return %arg0, %c0_i32, %arg1 : i32, i32, i32
  }
  func.func @transform_1(%arg0: i32, %arg1: i32) -> (i32, i32, i32) {
    %c0_i32 = arith.constant 0 : i32
    %c0_i32_0 = arith.constant 0 : i32
    return %arg0, %c0_i32, %arg1 : i32, i32, i32
  }
  func.func @transform_2(%arg0: i32, %arg1: i32) -> (i32, i32, i32) {
    %c0_i32 = arith.constant 0 : i32
    %c0_i32_0 = arith.constant 0 : i32
    %c0_i32_1 = arith.constant 0 : i32
    %c0_i32_2 = arith.constant 0 : i32
    return %c0_i32, %c0_i32_0, %c0_i32_1 : i32, i32, i32
  }
  func.func @transform_3(%arg0: i32, %arg1: i32) -> (i32, i32, i32) {
    %c0_i32 = arith.constant 0 : i32
    %c0_i32_0 = arith.constant 0 : i32
    %c0_i32_1 = arith.constant 0 : i32
    return %arg0, %c0_i32, %c0_i32_0 : i32, i32, i32
  }
}

</mosaic_0001>

<llo_original>
// kernel: tpu_custom_call.1
$region0: #{tpu_custom_call.1}
  #allocation0 [shape = 'u32[]', space=smem, size = 0x4, offset = 0x4, fixed_abs, tag = 'smem constant byte address 0x4 - core index']
  #allocation1 [shape = 'u32[72,128]{1,0:T(1,128)}', space=vmem, size = 0x9000, scoped, tag = 'internal scratch']
  %s0 = inlined_call_operand.hbm [shape: f32[2,4,256], index: 0, kind: input, shape index: {}]
  %s1 = inlined_call_operand.vmem [shape: s32[2,1,256], index: 1, kind: input, shape index: {}]
  %s2 = inlined_call_operand.vmem [shape: f32[1,4,1], index: 2, kind: input, shape index: {}]
  %s3 = inlined_call_operand.hbm [shape: f32[2,1,256], index: 3, kind: output, shape index: {}]
  %s4 = sld [smem:[#allocation0]]
  $region53: #{tpu_custom_call.1} parent=0
    _
  %s6 = ssub.s32 1, %s4
  %s7 = scalar_select 0, %s6, %s4
  $region1: #{tpu_custom_call.1} parent=0
    #allocation2 [shape = 'u8[8192]{0}', space=vmem, size = 0x2000, scoped, tag = 'input window, operand 0']
    #allocation3 [shape = 's32[2]{0}', space=sflag, size = 0x8, scoped, tag = 'scoped memory for tpu_custom_call.1']
    #allocation4 [shape = 's32[2]{0}', space=sflag, size = 0x8, scoped, tag = 'scoped memory for tpu_custom_call.1']
    #allocation5 [shape = 'u8[2048]{0}', space=vmem, size = 0x800, scoped, tag = 'output window, operand 0']
    %8 = vsyncpa [#allocation3], 0
    %s9 = scalar_lea.sflag [#allocation3], 1
    %10 = vsyncpa %s9, 0
    %11 = vsyncpa [#allocation4], 0
    %s12 = scalar_lea.sflag [#allocation4], 1
    %13 = vsyncpa %s12, 0
    loop: start=0, step=1, limit=4
    $region2: #{tpu_custom_call.1} parent=1 // loop_pre_header
      _
    $region3: #{tpu_custom_call.1} parent=1 // loop_header
      %s15 = sphi 0, %s19
      %p16 = scmp.ge.s32.totalorder %s15, 4
      %s22 = sphi 0, %s34
      %s23 = sphi 0, %s30
      %s24 = sphi 0, %s22
      %s25 = sphi 0, %s23
      %s26 = sphi 0, %s24
      %s27 = sphi 0, %s25
      %s39 = sphi 0, %s41
      %s42 = sphi 0, %s39
      %s43 = sphi 0, %s42
      %s59 = sphi 0, %s43
      %s67 = sphi 0, %s69
      %s70 = sphi 0, %s67
      %s71 = sphi 0, %s70
      %s87 = sphi 0, %s71
      %s91 = sphi 0, %s91
      %s93 = sphi 0, %s91
      %s94 = sphi 0, %s93
      %s108 = sphi 0, %s94
      %s114 = sphi 0, %s116
      %s117 = sphi 0, %s114
      %s118 = sphi 0, %s117
      %s134 = sphi 0, %s118
    $region4: #{tpu_custom_call.1} parent=1 // loop_header_branch
      %18 = sbr.rel (%p16) target = $region8
    $region5: #{tpu_custom_call.1} parent=1 // loop_body
      %s20 = ssub.s32 %s15, 1
      %s21 = ssub.s32 %s15, 2
      %s28 = sadd.s32 1, %s23
      %p29 = scmp.ge.s32.totalorder %s28, 1
      %s30 = scalar_select %p29, 0, %s28
      %s31 = sadd.s32 1, %s22
      %s32 = scalar_select %p29, %s31, %s22
      %p33 = scmp.ge.s32.totalorder %s32, 2
      %s34 = scalar_select %p33, 0, %s32
      %s35 = ssub.s32 %s22, %s34
      %s36 = ssub.s32 %s23, %s30
      %s37 = sor.u32 %s35, %s36
      %p38 = scmp.eq.s32.totalorder %s37, 0
      %s40 = sadd.s32 %s39, 1
      %s41 = scalar_select %p38, %s39, %s40
      %p44 = pneg %p38
      %p45 = scmp.eq.s32.totalorder %s15, 1
      %p46 = por %p44, %p45
      %p47 = scmp.ne.s32.totalorder %s39, %s42
      %p48 = scmp.eq.s32.totalorder %s15, 0
      %p49 = por %p47, %p48
      %p50 = scmp.ne.s32.totalorder %s39, %s42
      %p51 = scmp.eq.s32.totalorder %s20, 1
      %p52 = por %p50, %p51
      %p53 = scmp.ne.s32.totalorder %s42, %s43
      %p54 = scmp.eq.s32.totalorder %s20, 0
      %p55 = por %p53, %p54
      %p56 = scmp.ne.s32.totalorder %s42, %s43
      %p57 = scmp.eq.s32.totalorder %s21, 1
      %p58 = por %p56, %p57
      %p60 = scmp.ne.s32.totalorder %s43, %s59
      %p61 = scmp.eq.s32.totalorder %s21, 0
      %p62 = por %p60, %p61
      %s63 = ssub.s32 %s22, %s34
      %s64 = ssub.s32 %s23, %s30
      %s65 = sor.u32 %s63, %s64
      %p66 = scmp.eq.s32.totalorder %s65, 0
      %s68 = sadd.s32 %s67, 1
      %s69 = scalar_select %p66, %s67, %s68
      %p72 = pneg %p66
      %p73 = scmp.eq.s32.totalorder %s15, 1
      %p74 = por %p72, %p73
      %p75 = scmp.ne.s32.totalorder %s67, %s70
      %p76 = scmp.eq.s32.totalorder %s15, 0
      %p77 = por %p75, %p76
      %p78 = scmp.ne.s32.totalorder %s67, %s70
      %p79 = scmp.eq.s32.totalorder %s20, 1
      %p80 = por %p78, %p79
      %p81 = scmp.ne.s32.totalorder %s70, %s71
      %p82 = scmp.eq.s32.totalorder %s20, 0
      %p83 = por %p81, %p82
      %p84 = scmp.ne.s32.totalorder %s70, %s71
      %p85 = scmp.eq.s32.totalorder %s21, 1
      %p86 = por %p84, %p85
      %p88 = scmp.ne.s32.totalorder %s71, %s87
      %p89 = scmp.eq.s32.totalorder %s21, 0
      %p90 = por %p88, %p89
      %s92 = sadd.s32 %s91, 1
      %p95 = scmp.eq.s32.totalorder %s15, 1
      %p96 = scmp.ne.s32.totalorder %s91, %s93
      %p97 = scmp.eq.s32.totalorder %s15, 0
      %p98 = por %p96, %p97
      %p99 = scmp.ne.s32.totalorder %s91, %s93
      %p100 = scmp.eq.s32.totalorder %s20, 1
      %p101 = por %p99, %p100
      %p102 = scmp.ne.s32.totalorder %s93, %s94
      %p103 = scmp.eq.s32.totalorder %s20, 0
      %p104 = por %p102, %p103
      %p105 = scmp.ne.s32.totalorder %s93, %s94
      %p106 = scmp.eq.s32.totalorder %s21, 1
      %p107 = por %p105, %p106
      %p109 = scmp.ne.s32.totalorder %s94, %s108
      %p110 = scmp.eq.s32.totalorder %s21, 0
      %p111 = por %p109, %p110
      %s112 = ssub.s32 %s22, %s34
      %p113 = scmp.eq.s32.totalorder %s112, 0
      %s115 = sadd.s32 %s114, 1
      %s116 = scalar_select %p113, %s114, %s115
      %p119 = pneg %p113
      %p120 = scmp.eq.s32.totalorder %s15, 1
      %p121 = por %p119, %p120
      %p122 = scmp.ne.s32.totalorder %s114, %s117
      %p123 = scmp.eq.s32.totalorder %s15, 0
      %p124 = por %p122, %p123
      %p125 = scmp.ne.s32.totalorder %s114, %s117
      %p126 = scmp.eq.s32.totalorder %s20, 1
      %p127 = por %p125, %p126
      %p128 = scmp.ne.s32.totalorder %s117, %s118
      %p129 = scmp.eq.s32.totalorder %s20, 0
      %p130 = por %p128, %p129
      %p131 = scmp.ne.s32.totalorder %s117, %s118
      %p132 = scmp.eq.s32.totalorder %s21, 1
      %p133 = por %p131, %p132
      %p135 = scmp.ne.s32.totalorder %s118, %s134
      %p136 = scmp.eq.s32.totalorder %s21, 0
      %p137 = por %p135, %p136
      %p138 = scmp.le.s32.totalorder 1, %s15
      %p139 = scmp.lt.s32.totalorder %s15, 3
      %p140 = pnand %p138, %p139
      %p141 = pneg %p140
      // Predicated region
      $region9: #{tpu_custom_call.1} parent=5 // pred_check
        _
      $region10: #{tpu_custom_call.1} parent=5 // pred_check_branch
        %143 = sbr.rel (%p140) target = $region12
      $region11: #{tpu_custom_call.1} parent=5 // pred_region
        %s144 = ssub.s32 %s15, 1
        // Predicated region
        $region13: #{tpu_custom_call.1} parent=11 // pred_check
          %p145 = pneg %p104
        $region14: #{tpu_custom_call.1} parent=11 // pred_check_branch
          %147 = sbr.rel (%p145) target = $region16
        $region15: #{tpu_custom_call.1} parent=11 // pred_region
          _
        $region16: #{tpu_custom_call.1} parent=11 // pred_fallthru
          _
      $region12: #{tpu_custom_call.1} parent=5 // pred_fallthru
        _
      %p148 = scmp.lt.s32.totalorder %s15, 2
      // Predicated region
      $region17: #{tpu_custom_call.1} parent=5 // pred_check
        %p149 = pneg %p148
      $region18: #{tpu_custom_call.1} parent=5 // pred_check_branch
        %151 = sbr.rel (%p149) target = $region20
      $region19: #{tpu_custom_call.1} parent=5 // pred_region
        // Predicated region
        $region21: #{tpu_custom_call.1} parent=19 // pred_check
          %p152 = pneg %p49
        $region22: #{tpu_custom_call.1} parent=19 // pred_check_branch
          %154 = sbr.rel (%p152) target = $region24
        $region23: #{tpu_custom_call.1} parent=19 // pred_region
          %s155 = sand.u32 %s39, 1
          %s156 = scalar_lea.sflag [#allocation3], %s155
          %s157 = sand.u32 %s39, 1
          %s158 = smul.addr %s157, 8
          %s159 = scalar_lea.vmem [#allocation2], %s158
          %s160 = smul.u32 2, %s23
          %162 = vsyncadd %s156, 0
          %s163 = smul.addr %s22, 2
          %s164 = sadd.s32 %s160, %s163
          %s165 = smul.addr %s164, 4
          %s166 = scalar_lea.hbm %s0, %s165
          %s168 = sshll.u32 %s166, 4
          %s169 = int_to_ptr.hbm [resolvable:$true] %s168
          %s170 = sshll.u32 %s159, 4
          %s171 = int_to_ptr.vmem [resolvable:$true] %s170
          %173 = dma.hbm_to_vmem [thread:$0]  %s169, 128, %s171, %s156
        $region24: #{tpu_custom_call.1} parent=19 // pred_fallthru
          _
        // Predicated region
        $region25: #{tpu_custom_call.1} parent=19 // pred_check
          %p174 = pneg %p77
        $region26: #{tpu_custom_call.1} parent=19 // pred_check_branch
          %176 = sbr.rel (%p174) target = $region28
        $region27: #{tpu_custom_call.1} parent=19 // pred_region
          %s177 = smul.u32 2, %s23
          %p178 = scmp.lt.s32.totalorder %s22, 1
          %s179 = scalar_select %p178, %s22, 1
          %p180 = scmp.lt.s32.totalorder %s177, 1
          %s181 = scalar_select %p180, %s177, 1
          %s182 = smul.addr %s179, 2
          %s183 = sadd.s32 %s181, %s182
          %s184 = scalar_lea.vmem %s1, %s183
          %s185 = smul.u32 2, %s23
        $region28: #{tpu_custom_call.1} parent=19 // pred_fallthru
          _
      $region20: #{tpu_custom_call.1} parent=5 // pred_fallthru
        _
      %p186 = scmp.le.s32.totalorder 1, %s15
      %p187 = scmp.lt.s32.totalorder %s15, 3
      %p188 = pnand %p186, %p187
      %p189 = pneg %p188
      // Predicated region
      $region29: #{tpu_custom_call.1} parent=5 // pred_check
        _
      $region30: #{tpu_custom_call.1} parent=5 // pred_check_branch
        %191 = sbr.rel (%p188) target = $region32
      $region31: #{tpu_custom_call.1} parent=5 // pred_region
        %s192 = ssub.s32 %s15, 1
        %s193 = sand.u32 %s42, 1
        %s194 = scalar_lea.sflag [#allocation3], %s193
        %s195 = sand.u32 %s42, 1
        %s196 = smul.addr %s195, 8
        %s197 = scalar_lea.vmem [#allocation2], %s196
        // Predicated region
        $region33: #{tpu_custom_call.1} parent=31 // pred_check
          %p198 = pneg %p55
        $region34: #{tpu_custom_call.1} parent=31 // pred_check_branch
          %200 = sbr.rel (%p198) target = $region36
        $region35: #{tpu_custom_call.1} parent=31 // pred_region
          %202 = dma.done %s194, 128
        $region36: #{tpu_custom_call.1} parent=31 // pred_fallthru
          _
        %s203 = sand.u32 %s42, 1
        %s204 = scalar_lea.sflag [#allocation3], %s203
        %s205 = sand.u32 %s42, 1
        %s206 = smul.addr %s205, 8
        %s207 = scalar_lea.vmem [#allocation2], %s206
        %p208 = pneg %p55
        %p209 = pneg %p52
        %s210 = smul.u32 2, %s25
        %p211 = scmp.lt.s32.totalorder %s24, 1
        %s212 = scalar_select %p211, %s24, 1
        %p213 = scmp.lt.s32.totalorder %s210, 1
        %s214 = scalar_select %p213, %s210, 1
        %s215 = smul.addr %s212, 2
        %s216 = sadd.s32 %s214, %s215
        %s217 = scalar_lea.vmem %s1, %s216
        %p218 = pneg %p83
        %p219 = pneg %p80
        %p220 = pneg %p104
        %p221 = pneg %p101
        %p222 = pneg %p130
        %p223 = pneg %p127
        %s224 = sand.u32 %s117, 1
        %s225 = scalar_lea.sflag [#allocation4], %s224
        %s226 = sand.u32 %s117, 1
        %s227 = smul.addr %s226, 2
        %s228 = scalar_lea.vmem [#allocation5], %s227
        %s229 = smul.u32 2, %s25
        %s230 = smul.u32 2, %s25
        %p231 = scmp.lt.s32.totalorder %s24, 1
        %s232 = scalar_select %p231, %s24, 1
        %p233 = scmp.lt.s32.totalorder %s230, 1
        %s234 = scalar_select %p233, %s230, 1
        %s235 = smul.addr %s232, 2
        %s236 = sadd.s32 %s234, %s235
        %s237 = scalar_lea.vmem %s1, %s236
        %s238 = smul.u32 2, %s25
        %p239 = scmp.eq.s32.totalorder %s25, 0
        // Predicated region
        $region37: #{tpu_custom_call.1} parent=31 // pred_check
          %p240 = pneg %p239
        $region38: #{tpu_custom_call.1} parent=31 // pred_check_branch
          %242 = sbr.rel (%p240) target = $region40
        $region39: #{tpu_custom_call.1} parent=31 // pred_region
          %v243 = vlaneseq
          %vm244 = vcmp.ge.s32.totalorder %v243, 0
          %vm245 = vcmp.lt.s32.totalorder %v243, 256
          %vm246 = vmand %vm244, %vm245
          %247 = vst.msk [vmem:[%s228] sm:$0x3] %vm246, 0.0
        $region40: #{tpu_custom_call.1} parent=31 // pred_fallthru
          _
        %v248 = vld [vmem:[%s197] sm:$0xff]
        %v249 = vld [vmem:[%s237] sm:$0x3]
        %v250 = vld [vmem:[%s2] sm:$0xf]
        %252 = vst [vmem:[#allocation1] ss:$2 sm:$0xff] %v248
        %v253 = vld.sshfl [vmem:[#allocation1] sm:$0xff pattern:$0x75316420]
        %v254 = vld.sshfl [vmem:[#allocation1 + $0x8] sm:$0xff pattern:$0x75316420]
        %vm257 = vcmask 1043456
        %v258 = vsel %vm257, %v253, -inf
        %v259 = vrot.slane %v258, 4
        %v260 = vmax.f32 %v258, %v259
        %v261 = vrot.slane %v260, 2
        %v262 = vmax.f32 %v260, %v261
        %v263 = vrot.slane %v262, 1
        %v264 = vmax.f32 %v262, %v263
        %v265 = vsel %vm257, %v254, -inf
        %v266 = vrot.slane %v265, 4
        %v267 = vmax.f32 %v265, %v266
        %v268 = vrot.slane %v267, 2
        %v269 = vmax.f32 %v267, %v268
        %v270 = vrot.slane %v269, 1
        %v271 = vmax.f32 %v269, %v270
        %v274 = vrot.slane %v271, 4
        %v275 = vsel %vm257, %v264, %v274
        %v277 = vsub.f32 %v248, %v275
        %v278 = vmul.f32 %v277, 1.442695
        %v279 = vpow.pop %v278
        %281 = vst [vmem:[#allocation1] ss:$2 sm:$0xff] %v279
        %v282 = vld.sshfl [vmem:[#allocation1] sm:$0xff pattern:$0x75316420]
        %v283 = vld.sshfl [vmem:[#allocation1 + $0x8] sm:$0xff pattern:$0x75316420]
        %v286 = vsel %vm257, %v282, 0.0
        %v287 = vrot.slane %v286, 4
        %v288 = vadd.f32 %v286, %v287
        %v289 = vrot.slane %v288, 2
        %v290 = vadd.f32 %v288, %v289
        %v291 = vrot.slane %v290, 1
        %v292 = vadd.f32 %v290, %v291
        %v293 = vsel %vm257, %v283, 0.0
        %v294 = vrot.slane %v293, 4
        %v295 = vadd.f32 %v293, %v294
        %v296 = vrot.slane %v295, 2
        %v297 = vadd.f32 %v295, %v296
        %v298 = vrot.slane %v297, 1
        %v299 = vadd.f32 %v297, %v298
        %v300 = vlog2.pop %v292
        %v301 = vmul.f32 %v300, 0.6931472
        %v302 = vlog2.pop %v299
        %v303 = vmul.f32 %v302, 0.6931472
        %v304 = vlaneseq
        %v305 = vshrl.u32 %v304, 7
        %v306 = vperm.slane %v249, 0
        %v307 = vperm.slane %v249, 1
        %vm308 = vcmp.eq.s32.totalorder %v305, %v306
        %vm309 = vcmp.eq.s32.totalorder %v305, %v307
        %v310 = vsel %vm308, 1, 0
        %v311 = vsel %vm309, 1, 0
        %v312 = vcvt.s32.f32 %v310
        %v313 = vcvt.s32.f32 %v311
        %v316 = vrot.slane %v313, 4
        %v317 = vsel %vm257, %v312, %v316
        %v319 = vmul.f32 %v277, %v317
        %321 = vst [vmem:[#allocation1] ss:$2 sm:$0xff] %v319
        %v322 = vld.sshfl [vmem:[#allocation1] sm:$0xff pattern:$0x75316420]
        %v323 = vld.sshfl [vmem:[#allocation1 + $0x8] sm:$0xff pattern:$0x75316420]
        %v326 = vsel %vm257, %v322, 0.0
        %v327 = vrot.slane %v326, 4
        %v328 = vadd.f32 %v326, %v327
        %v329 = vrot.slane %v328, 2
        %v330 = vadd.f32 %v328, %v329
        %v331 = vrot.slane %v330, 1
        %v332 = vadd.f32 %v330, %v331
        %v333 = vsel %vm257, %v323, 0.0
        %v334 = vrot.slane %v333, 4
        %v335 = vadd.f32 %v333, %v334
        %v336 = vrot.slane %v335, 2
        %v337 = vadd.f32 %v335, %v336
        %v338 = vrot.slane %v337, 1
        %v339 = vadd.f32 %v337, %v338
        %v340 = vsub.f32 %v332, %v301
        %v341 = vsub.f32 %v339, %v303
        %v342 = vmul.f32 %v340, 1.442695
        %v343 = vpow.pop %v342
        %v344 = vmul.f32 %v341, 1.442695
        %v345 = vpow.pop %v344
        %347 = vset.pattern.permute.xlu0 0
        %348 = vperm.xlu0 %347, %v250
        %v349 = vpop.permute.xlu0 %348
        %v351 = vmul.f32 %v349, %v312
        %v352 = vmul.f32 %v349, %v313
        %v353 = vsel %vm257, %v351, 0.0
        %v354 = vrot.slane %v353, 4
        %v355 = vadd.f32 %v353, %v354
        %v356 = vrot.slane %v355, 2
        %v357 = vadd.f32 %v355, %v356
        %v358 = vrot.slane %v357, 1
        %v359 = vadd.f32 %v357, %v358
        %v360 = vsel %vm257, %v352, 0.0
        %v361 = vrot.slane %v360, 4
        %v362 = vadd.f32 %v360, %v361
        %v363 = vrot.slane %v362, 2
        %v364 = vadd.f32 %v362, %v363
        %v365 = vrot.slane %v364, 1
        %v366 = vadd.f32 %v364, %v365
        %v367 = vsub.f32 1.0, %v343
        %v368 = vsub.f32 1.0, %v345
        %v369 = vmul.f32 %v367, %v367
        %v370 = vmul.f32 %v368, %v368
        %v371 = vmul.f32 %v369, -1.0
        %v372 = vmul.f32 %v370, -1.0
        %v373 = vmul.f32 %v371, %v340
        %v374 = vmul.f32 %v372, %v341
        %v375 = vmul.f32 %v373, %v359
        %v376 = vmul.f32 %v374, %v366
        %v377 = vld [vmem:[%s228] sm:$0x3]
        %v380 = vrot.slane %v376, 7
        %vm381 = vcmask 1040384
        %v382 = vsel %vm381, %v375, %v380
        %v384 = vadd.f32 %v377, %v382
        %v385 = vlaneseq
        %vm386 = vcmp.ge.s32.totalorder %v385, 0
        %vm387 = vcmp.lt.s32.totalorder %v385, 256
        %vm388 = vmand %vm386, %vm387
        %389 = vst.msk [vmem:[%s228] sm:$0x3] %vm388, %v384
        %s390 = sand.u32 %s117, 1
        %s391 = scalar_lea.sflag [#allocation4], %s390
        %s392 = sand.u32 %s117, 1
        %s393 = smul.addr %s392, 2
        %s394 = scalar_lea.vmem [#allocation5], %s393
        // Predicated region
        $region41: #{tpu_custom_call.1} parent=31 // pred_check
          %p395 = pneg %p127
        $region42: #{tpu_custom_call.1} parent=31 // pred_check_branch
          %397 = sbr.rel (%p395) target = $region44
        $region43: #{tpu_custom_call.1} parent=31 // pred_region
          %399 = vsyncadd %s391, 0
          %s400 = smul.addr %s24, 2
          %s401 = scalar_lea.hbm %s3, %s400
          %s403 = sshll.u32 %s394, 4
          %s404 = int_to_ptr.vmem [resolvable:$true] %s403
          %s405 = sshll.u32 %s401, 4
          %s406 = int_to_ptr.hbm [resolvable:$true] %s405
          %408 = dma.vmem_to_hbm [thread:$0]  %s404, 32, %s406, %s391
        $region44: #{tpu_custom_call.1} parent=31 // pred_fallthru
          _
      $region32: #{tpu_custom_call.1} parent=5 // pred_fallthru
        _
      %p409 = scmp.le.s32.totalorder 2, %s15
      // Predicated region
      $region45: #{tpu_custom_call.1} parent=5 // pred_check
        %p410 = pneg %p409
      $region46: #{tpu_custom_call.1} parent=5 // pred_check_branch
        %412 = sbr.rel (%p410) target = $region48
      $region47: #{tpu_custom_call.1} parent=5 // pred_region
        %s413 = ssub.s32 %s15, 2
        // Predicated region
        $region49: #{tpu_custom_call.1} parent=47 // pred_check
          %p414 = pneg %p133
        $region50: #{tpu_custom_call.1} parent=47 // pred_check_branch
          %416 = sbr.rel (%p414) target = $region52
        $region51: #{tpu_custom_call.1} parent=47 // pred_region
          %s417 = sand.u32 %s118, 1
          %s418 = scalar_lea.sflag [#allocation4], %s417
          %s419 = sand.u32 %s118, 1
          %s420 = smul.addr %s419, 2
          %s421 = scalar_lea.vmem [#allocation5], %s420
          %423 = dma.done %s418, 32
        $region52: #{tpu_custom_call.1} parent=47 // pred_fallthru
          _
      $region48: #{tpu_custom_call.1} parent=5 // pred_fallthru
        _
    $region6: #{tpu_custom_call.1} parent=1 // loop_footer
      %s19 = sadd.s32 1, %s15
    $region7: #{tpu_custom_call.1} parent=1 // loop_footer_branch
      %14 = sbr.rel target = $region3
    $region8: #{tpu_custom_call.1} parent=1 // loop_exit
      _
    %424 = vsyncpa [#allocation3], 1
    %s425 = scalar_lea.sflag [#allocation3], 1
    %426 = vsyncpa %s425, 1
    %427 = vsyncpa [#allocation4], 1
    %s428 = scalar_lea.sflag [#allocation4], 1
    %429 = vsyncpa %s428, 1

</llo_original>
